<compile_context>
chip_gen: v7x
topology: tpu7x:2x2x1
jax: 0.10.0
libtpu: 0.0.40
codegen_flags: <defaults>
</compile_context>

<pallas_src>
import jax
import jax.numpy as jnp
from jax.experimental import pallas as pl
from jax.experimental.pallas import tpu as pltpu


# ----------------------------------------------------------------------------
# Fused kernel: all layers of one modality's predictor per grid step.
# Ref order: x, [W_i, vec_i] * n_hidden, wout_pack, out
#   W_i      : (din_i, dout_i)
#   vec_i    : (3, dout_i)        rows = [bias, ln_gamma, ln_beta]
#   wout_pack: (din_last + 1, OUT_PAD)   last row = output bias (zero-padded cols)
#   out      : (B, OUT_PAD)
# ----------------------------------------------------------------------------
def _make_mlp_kernel(n_hidden: int, din_last: int, eps: float = 1e-5):
    def kernel(*refs):
        x_ref = refs[0]
        wout_ref = refs[-2]
        out_ref = refs[-1]

        h = x_ref[...].astype(jnp.float32)

        idx = 1
        for _ in range(n_hidden):
            w_ref = refs[idx]
            v_ref = refs[idx + 1]
            idx += 2

            vec = v_ref[...]                                   # (3, dout)

            # Linear (MXU, f32 accumulate)
            h = jnp.dot(h, w_ref[...], preferred_element_type=jnp.float32)
            h = h + vec[0:1, :]                                # bias broadcast

            # LayerNorm over features (one-pass variance; clamp vs cancellation)
            mean = jnp.mean(h, axis=-1, keepdims=True)
            msq = jnp.mean(h * h, axis=-1, keepdims=True)
            var = jnp.maximum(msq - mean * mean, 0.0)
            h = (h - mean) * jax.lax.rsqrt(var + eps)
            h = h * vec[1:2, :] + vec[2:3, :]                  # gamma, beta

            # Mish: x * tanh(softplus(x)) == x * t(t+2) / (t(t+2)+2), t = e^x.
            # Single exp instead of exp+log1p+tanh on the EUP; clamp keeps the
            # ratio finite (mish(x) == x to f32 precision for x > 20).
            t = jnp.exp(jnp.minimum(h, 20.0))
            u = t * (t + 2.0)
            h = h * (u / (u + 2.0))

            # Dropout: identity in eval mode.
            # TODO(synk): training-mode dropout (hid_drop) not implemented; eval semantics only.

        # Output Linear (weights + bias packed into one (din_last+1, OUT_PAD) slab)
        w_out = wout_ref[0:din_last, :]
        b_out = wout_ref[din_last:din_last + 1, :]
        out = jnp.dot(h, w_out, preferred_element_type=jnp.float32) + b_out
        out_ref[...] = out.astype(out_ref.dtype)

    return kernel


# ----------------------------------------------------------------------------
# Parameter construction (mirrors torch nn.Linear / nn.LayerNorm init)
# ----------------------------------------------------------------------------
def _init_linear(key, fan_in, fan_out):
    kw, kb = jax.random.split(key)
    bound = 1.0 / jnp.sqrt(jnp.float32(fan_in))
    W = jax.random.uniform(kw, (fan_in, fan_out), jnp.float32, -bound, bound)
    b = jax.random.uniform(kb, (1, fan_out), jnp.float32, -bound, bound)
    return W, b


def build_discriminator_params(key, dim_c, dims_dsc, dims_s):
    """One MLP per modality: features = [dim_c] + dims_dsc + [dims_s[m]]."""
    params = {}
    for modality, out_dim in dims_s.items():
        features = [dim_c] + list(dims_dsc) + [out_dim]
        hidden = []
        for i in range(len(features) - 2):
            key, sub = jax.random.split(key)
            W, b = _init_linear(sub, features[i], features[i + 1])
            hidden.append({
                "W": W,
                "b": b,
                "g": jnp.ones((1, features[i + 1]), jnp.float32),      # LN weight
                "beta": jnp.zeros((1, features[i + 1]), jnp.float32),  # LN bias
            })
        key, sub = jax.random.split(key)
        Wo, bo = _init_linear(sub, features[-2], features[-1])
        params[modality] = {"hidden": hidden, "out": {"W": Wo, "b": bo}}
    return params


# ----------------------------------------------------------------------------
# Pack per-modality params into modality-stacked arrays (done ONCE, not per call)
# ----------------------------------------------------------------------------
def pack_discriminator_params(params, modalities):
    n_hidden = len(params[modalities[0]]["hidden"])
    din_last = params[modalities[0]]["out"]["W"].shape[0]
    out_dims = {m: int(params[m]["out"]["W"].shape[1]) for m in modalities}
    out_pad = 128 * max(1, pl.cdiv(max(out_dims.values()), 128))   # lane-dense slab

    w_layers, vec_layers = [], []
    for i in range(n_hidden):
        w_layers.append(jnp.stack(
            [params[m]["hidden"][i]["W"] for m in modalities], axis=0))       # (M,din,dout)
        vec_layers.append(jnp.stack(
            [jnp.concatenate([params[m]["hidden"][i]["b"],
                              params[m]["hidden"][i]["g"],
                              params[m]["hidden"][i]["beta"]], axis=0)
             for m in modalities], axis=0))                                   # (M,3,dout)

    wout_list = []
    for m in modalities:
        W, b = params[m]["out"]["W"], params[m]["out"]["b"]
        Wp = jnp.zeros((din_last, out_pad), jnp.float32).at[:, :W.shape[1]].set(W)
        bp = jnp.zeros((1, out_pad), jnp.float32).at[:, :b.shape[1]].set(b)
        wout_list.append(jnp.concatenate([Wp, bp], axis=0))                   # (din_last+1,PAD)
    wout_all = jnp.stack(wout_list, axis=0)                                   # (M,din_last+1,PAD)

    return {
        "modalities": list(modalities),
        "n_hidden": n_hidden,
        "din_last": din_last,
        "out_pad": out_pad,
        "out_dims": out_dims,
        "w_layers": w_layers,
        "vec_layers": vec_layers,
        "wout": wout_all,
    }


# ----------------------------------------------------------------------------
# Fused forward: one pallas_call over a modality grid.
# ----------------------------------------------------------------------------
def discriminator_forward(latent_inputs, packed):
    modalities = packed["modalities"]
    M = len(modalities)
    x_all = jnp.stack([latent_inputs[m] for m in modalities], axis=0)   # (M,B,dim_c)
    _, B, dim_c = x_all.shape
    n_hidden = packed["n_hidden"]
    din_last = packed["din_last"]
    out_pad = packed["out_pad"]

    flat_inputs = [x_all]
    in_specs = [pl.BlockSpec((None, B, dim_c), lambda m: (m, 0, 0))]
    for i in range(n_hidden):
        Wi, Vi = packed["w_layers"][i], packed["vec_layers"][i]
        flat_inputs += [Wi, Vi]
        in_specs += [
            pl.BlockSpec((None,) + Wi.shape[1:], lambda m: (m, 0, 0)),
            pl.BlockSpec((None,) + Vi.shape[1:], lambda m: (m, 0, 0)),
        ]
    flat_inputs.append(packed["wout"])
    in_specs.append(pl.BlockSpec((None, din_last + 1, out_pad), lambda m: (m, 0, 0)))

    kernel = _make_mlp_kernel(n_hidden, din_last)

    # TODO(synk): add a batch grid axis (weights' index_map ignoring it) once B
    # grows beyond a few hundred rows; at B=4 a single block per modality is fine.
    out_all = pl.pallas_call(
        kernel,
        out_shape=jax.ShapeDtypeStruct((M, B, out_pad), jnp.float32),
        grid=(M,),
        in_specs=in_specs,
        out_specs=pl.BlockSpec((None, B, out_pad), lambda m: (m, 0, 0)),
        compiler_params=pltpu.CompilerParams(
            dimension_semantics=("parallel",),   # modalities split across TCs on v7x
        ),
    )(*flat_inputs)

    # Slice the lane-padded slab back to each head's true width.
    return {m: out_all[i, :, : packed["out_dims"][m]] for i, m in enumerate(modalities)}


# ----------------------------------------------------------------------------
# Pure-JAX reference (torch semantics: two-pass LN variance, tanh(softplus) Mish)
# ----------------------------------------------------------------------------
def _mlp_ref(x, hidden_params, out_params, eps=1e-5):
    h = x.astype(jnp.float32)
    for p in hidden_params:
        h = h @ p["W"] + p["b"]
        mean = jnp.mean(h, axis=-1, keepdims=True)
        var = jnp.mean((h - mean) ** 2, axis=-1, keepdims=True)
        h = (h - mean) * jax.lax.rsqrt(var + eps)
        h = h * p["g"] + p["beta"]
        h = h * jnp.tanh(jax.nn.softplus(h))
    return h @ out_params["W"] + out_params["b"]


# ----------------------------------------------------------------------------
if __name__ == "__main__":
    # Small deterministic configuration consistent with the module:
    #   modalities = ['rna', 'adt', 'joint'], dim_c = 32, dims_dsc = [64, 64]
    batch = 4
    dim_c = 32
    dims_dsc = [64, 64]
    dims_s = {"rna": 4, "adt": 3, "joint": 6}

    key = jax.random.PRNGKey(0)
    key, pkey = jax.random.split(key)
    params = build_discriminator_params(pkey, dim_c, dims_dsc, dims_s)
    packed = pack_discriminator_params(params, list(dims_s.keys()))

    latent_inputs = {}
    for modality in dims_s:
        key, sub = jax.random.split(key)
        latent_inputs[modality] = jax.random.normal(sub, (batch, dim_c), jnp.float32)

    logits = discriminator_forward(latent_inputs, packed)
    logits = jax.tree_util.tree_map(jax.block_until_ready, logits)

    # Sanity check against the pure-JAX reference.
    for modality, latent in latent_inputs.items():
        ref = _mlp_ref(latent, params[modality]["hidden"], params[modality]["out"])
        assert logits[modality].shape == (batch, dims_s[modality])
        assert jnp.allclose(logits[modality], ref, atol=1e-3, rtol=1e-3), modality

    print("KERNEL_OK")
</pallas_src>

<mosaic_0001>
module attributes {stable_mosaic.version = 11 : i64} {
  func.func @kernel(%arg0: i32, %arg1: memref<1x4x32xf32, #tpu.memory_space<vmem>>, %arg2: memref<1x32x64xf32, #tpu.memory_space<vmem>>, %arg3: memref<1x3x64xf32, #tpu.memory_space<vmem>>, %arg4: memref<1x64x64xf32, #tpu.memory_space<vmem>>, %arg5: memref<1x3x64xf32, #tpu.memory_space<vmem>>, %arg6: memref<1x65x128xf32, #tpu.memory_space<vmem>>, %arg7: memref<1x4x128xf32, #tpu.memory_space<vmem>>) attributes {dimension_semantics = [#tpu.dimension_semantics<parallel>], iteration_bounds = array<i64: 3>, scalar_prefetch = 0 : i64, scratch_operands = 0 : i64, tpu.core_type = #tpu.core_type<tc>, window_params = [{transform_indices = @transform_0, window_bounds = array<i64: 1, 4, 32>}, {transform_indices = @transform_1, window_bounds = array<i64: 1, 32, 64>}, {transform_indices = @transform_2, window_bounds = array<i64: 1, 3, 64>}, {transform_indices = @transform_3, window_bounds = array<i64: 1, 64, 64>}, {transform_indices = @transform_4, window_bounds = array<i64: 1, 3, 64>}, {transform_indices = @transform_5, window_bounds = array<i64: 1, 65, 128>}, {transform_indices = @transform_6, window_bounds = array<i64: 1, 4, 128>}]} {
    %c0 = arith.constant 0 : index
    %c0_0 = arith.constant 0 : index
    %c0_1 = arith.constant 0 : index
    %0 = vector.load %arg1[%c0, %c0_0, %c0_1] : memref<1x4x32xf32, #tpu.memory_space<vmem>>, vector<1x4x32xf32>
    %1 = vector.shape_cast %0 : vector<1x4x32xf32> to vector<4x32xf32>
    %c0_2 = arith.constant 0 : index
    %c0_3 = arith.constant 0 : index
    %c0_4 = arith.constant 0 : index
    %2 = vector.load %arg3[%c0_2, %c0_3, %c0_4] : memref<1x3x64xf32, #tpu.memory_space<vmem>>, vector<1x3x64xf32>
    %3 = vector.shape_cast %2 : vector<1x3x64xf32> to vector<3x64xf32>
    %c0_5 = arith.constant 0 : index
    %c0_6 = arith.constant 0 : index
    %c0_7 = arith.constant 0 : index
    %4 = vector.load %arg2[%c0_5, %c0_6, %c0_7] : memref<1x32x64xf32, #tpu.memory_space<vmem>>, vector<1x32x64xf32>
    %5 = vector.shape_cast %4 : vector<1x32x64xf32> to vector<32x64xf32>
    %cst = arith.constant dense<0.000000e+00> : vector<4x64xf32>
    %6 = tpu.matmul %1, %5, %cst {dimension_numbers = #tpu.dot_dimension_numbers<[1], [0], [0], [1], [0, 0, 1, 1], [], []>} : vector<4x32xf32>, vector<32x64xf32>, vector<4x64xf32> -> vector<4x64xf32>
    %7 = vector.extract_strided_slice %3 {offsets = [0, 0], sizes = [1, 64], strides = [1, 1]} : vector<3x64xf32> to vector<1x64xf32>
    %8 = vector.broadcast %7 : vector<1x64xf32> to vector<4x64xf32>
    %9 = arith.addf %6, %8 : vector<4x64xf32>
    %cst_8 = arith.constant dense<0.000000e+00> : vector<4xf32>
    %10 = vector.multi_reduction <add>, %9, %cst_8 [1] : vector<4x64xf32> to vector<4xf32>
    %11 = vector.shape_cast %10 : vector<4xf32> to vector<4x1xf32>
    %cst_9 = arith.constant 6.400000e+01 : f32
    %12 = vector.broadcast %cst_9 : f32 to vector<4x1xf32>
    %13 = arith.divf %11, %12 : vector<4x1xf32>
    %14 = arith.mulf %9, %9 : vector<4x64xf32>
    %cst_10 = arith.constant dense<0.000000e+00> : vector<4xf32>
    %15 = vector.multi_reduction <add>, %14, %cst_10 [1] : vector<4x64xf32> to vector<4xf32>
    %16 = vector.shape_cast %15 : vector<4xf32> to vector<4x1xf32>
    %cst_11 = arith.constant 6.400000e+01 : f32
    %17 = vector.broadcast %cst_11 : f32 to vector<4x1xf32>
    %18 = arith.divf %16, %17 : vector<4x1xf32>
    %19 = arith.mulf %13, %13 : vector<4x1xf32>
    %20 = arith.subf %18, %19 : vector<4x1xf32>
    %cst_12 = arith.constant 0.000000e+00 : f32
    %21 = vector.broadcast %cst_12 : f32 to vector<4x1xf32>
    %22 = arith.maximumf %20, %21 : vector<4x1xf32>
    %23 = vector.broadcast %13 : vector<4x1xf32> to vector<4x64xf32>
    %24 = arith.subf %9, %23 : vector<4x64xf32>
    %cst_13 = arith.constant 9.99999974E-6 : f32
    %25 = vector.broadcast %cst_13 : f32 to vector<4x1xf32>
    %26 = arith.addf %22, %25 : vector<4x1xf32>
    %27 = math.rsqrt %26 : vector<4x1xf32>
    %28 = vector.broadcast %27 : vector<4x1xf32> to vector<4x64xf32>
    %29 = arith.mulf %24, %28 : vector<4x64xf32>
    %30 = vector.extract_strided_slice %3 {offsets = [1, 0], sizes = [1, 64], strides = [1, 1]} : vector<3x64xf32> to vector<1x64xf32>
    %31 = vector.broadcast %30 : vector<1x64xf32> to vector<4x64xf32>
    %32 = arith.mulf %29, %31 : vector<4x64xf32>
    %33 = vector.extract_strided_slice %3 {offsets = [2, 0], sizes = [1, 64], strides = [1, 1]} : vector<3x64xf32> to vector<1x64xf32>
    %34 = vector.broadcast %33 : vector<1x64xf32> to vector<4x64xf32>
    %35 = arith.addf %32, %34 : vector<4x64xf32>
    %cst_14 = arith.constant 2.000000e+01 : f32
    %36 = vector.broadcast %cst_14 : f32 to vector<4x64xf32>
    %37 = arith.minimumf %35, %36 : vector<4x64xf32>
    %38 = math.exp %37 : vector<4x64xf32>
    %cst_15 = arith.constant 2.000000e+00 : f32
    %39 = vector.broadcast %cst_15 : f32 to vector<4x64xf32>
    %40 = arith.addf %38, %39 : vector<4x64xf32>
    %41 = arith.mulf %38, %40 : vector<4x64xf32>
    %cst_16 = arith.constant 2.000000e+00 : f32
    %42 = vector.broadcast %cst_16 : f32 to vector<4x64xf32>
    %43 = arith.addf %41, %42 : vector<4x64xf32>
    %44 = arith.divf %41, %43 : vector<4x64xf32>
    %45 = arith.mulf %35, %44 : vector<4x64xf32>
    %c0_17 = arith.constant 0 : index
    %c0_18 = arith.constant 0 : index
    %c0_19 = arith.constant 0 : index
    %46 = vector.load %arg5[%c0_17, %c0_18, %c0_19] : memref<1x3x64xf32, #tpu.memory_space<vmem>>, vector<1x3x64xf32>
    %47 = vector.shape_cast %46 : vector<1x3x64xf32> to vector<3x64xf32>
    %c0_20 = arith.constant 0 : index
    %c0_21 = arith.constant 0 : index
    %c0_22 = arith.constant 0 : index
    %48 = vector.load %arg4[%c0_20, %c0_21, %c0_22] : memref<1x64x64xf32, #tpu.memory_space<vmem>>, vector<1x64x64xf32>
    %49 = vector.shape_cast %48 : vector<1x64x64xf32> to vector<64x64xf32>
    %cst_23 = arith.constant dense<0.000000e+00> : vector<4x64xf32>
    %50 = tpu.matmul %45, %49, %cst_23 {dimension_numbers = #tpu.dot_dimension_numbers<[1], [0], [0], [1], [0, 0, 1, 1], [], []>} : vector<4x64xf32>, vector<64x64xf32>, vector<4x64xf32> -> vector<4x64xf32>
    %51 = vector.extract_strided_slice %47 {offsets = [0, 0], sizes = [1, 64], strides = [1, 1]} : vector<3x64xf32> to vector<1x64xf32>
    %52 = vector.broadcast %51 : vector<1x64xf32> to vector<4x64xf32>
    %53 = arith.addf %50, %52 : vector<4x64xf32>
    %cst_24 = arith.constant dense<0.000000e+00> : vector<4xf32>
    %54 = vector.multi_reduction <add>, %53, %cst_24 [1] : vector<4x64xf32> to vector<4xf32>
    %55 = vector.shape_cast %54 : vector<4xf32> to vector<4x1xf32>
    %cst_25 = arith.constant 6.400000e+01 : f32
    %56 = vector.broadcast %cst_25 : f32 to vector<4x1xf32>
    %57 = arith.divf %55, %56 : vector<4x1xf32>
    %58 = arith.mulf %53, %53 : vector<4x64xf32>
    %cst_26 = arith.constant dense<0.000000e+00> : vector<4xf32>
    %59 = vector.multi_reduction <add>, %58, %cst_26 [1] : vector<4x64xf32> to vector<4xf32>
    %60 = vector.shape_cast %59 : vector<4xf32> to vector<4x1xf32>
    %cst_27 = arith.constant 6.400000e+01 : f32
    %61 = vector.broadcast %cst_27 : f32 to vector<4x1xf32>
    %62 = arith.divf %60, %61 : vector<4x1xf32>
    %63 = arith.mulf %57, %57 : vector<4x1xf32>
    %64 = arith.subf %62, %63 : vector<4x1xf32>
    %cst_28 = arith.constant 0.000000e+00 : f32
    %65 = vector.broadcast %cst_28 : f32 to vector<4x1xf32>
    %66 = arith.maximumf %64, %65 : vector<4x1xf32>
    %67 = vector.broadcast %57 : vector<4x1xf32> to vector<4x64xf32>
    %68 = arith.subf %53, %67 : vector<4x64xf32>
    %cst_29 = arith.constant 9.99999974E-6 : f32
    %69 = vector.broadcast %cst_29 : f32 to vector<4x1xf32>
    %70 = arith.addf %66, %69 : vector<4x1xf32>
    %71 = math.rsqrt %70 : vector<4x1xf32>
    %72 = vector.broadcast %71 : vector<4x1xf32> to vector<4x64xf32>
    %73 = arith.mulf %68, %72 : vector<4x64xf32>
    %74 = vector.extract_strided_slice %47 {offsets = [1, 0], sizes = [1, 64], strides = [1, 1]} : vector<3x64xf32> to vector<1x64xf32>
    %75 = vector.broadcast %74 : vector<1x64xf32> to vector<4x64xf32>
    %76 = arith.mulf %73, %75 : vector<4x64xf32>
    %77 = vector.extract_strided_slice %47 {offsets = [2, 0], sizes = [1, 64], strides = [1, 1]} : vector<3x64xf32> to vector<1x64xf32>
    %78 = vector.broadcast %77 : vector<1x64xf32> to vector<4x64xf32>
    %79 = arith.addf %76, %78 : vector<4x64xf32>
    %cst_30 = arith.constant 2.000000e+01 : f32
    %80 = vector.broadcast %cst_30 : f32 to vector<4x64xf32>
    %81 = arith.minimumf %79, %80 : vector<4x64xf32>
    %82 = math.exp %81 : vector<4x64xf32>
    %cst_31 = arith.constant 2.000000e+00 : f32
    %83 = vector.broadcast %cst_31 : f32 to vector<4x64xf32>
    %84 = arith.addf %82, %83 : vector<4x64xf32>
    %85 = arith.mulf %82, %84 : vector<4x64xf32>
    %cst_32 = arith.constant 2.000000e+00 : f32
    %86 = vector.broadcast %cst_32 : f32 to vector<4x64xf32>
    %87 = arith.addf %85, %86 : vector<4x64xf32>
    %88 = arith.divf %85, %87 : vector<4x64xf32>
    %89 = arith.mulf %79, %88 : vector<4x64xf32>
    %c0_33 = arith.constant 0 : index
    %c0_34 = arith.constant 0 : index
    %c0_35 = arith.constant 0 : index
    %90 = vector.load %arg6[%c0_33, %c0_34, %c0_35] : memref<1x65x128xf32, #tpu.memory_space<vmem>>, vector<1x64x128xf32>
    %91 = vector.shape_cast %90 : vector<1x64x128xf32> to vector<64x128xf32>
    %c0_36 = arith.constant 0 : index
    %c64 = arith.constant 64 : index
    %c0_37 = arith.constant 0 : index
    %92 = vector.load %arg6[%c0_36, %c64, %c0_37] : memref<1x65x128xf32, #tpu.memory_space<vmem>>, vector<1x1x128xf32>
    %93 = vector.shape_cast %92 : vector<1x1x128xf32> to vector<1x128xf32>
    %cst_38 = arith.constant dense<0.000000e+00> : vector<4x128xf32>
    %94 = tpu.matmul %89, %91, %cst_38 {dimension_numbers = #tpu.dot_dimension_numbers<[1], [0], [0], [1], [0, 0, 1, 1], [], []>} : vector<4x64xf32>, vector<64x128xf32>, vector<4x128xf32> -> vector<4x128xf32>
    %95 = vector.broadcast %93 : vector<1x128xf32> to vector<4x128xf32>
    %96 = arith.addf %94, %95 : vector<4x128xf32>
    %c0_39 = arith.constant 0 : index
    %c0_40 = arith.constant 0 : index
    %c0_41 = arith.constant 0 : index
    %97 = vector.load %arg7[%c0_39, %c0_40, %c0_41] : memref<1x4x128xf32, #tpu.memory_space<vmem>>, vector<1x4x128xf32>
    %98 = vector.shape_cast %97 : vector<1x4x128xf32> to vector<4x128xf32>
    %99 = vector.shape_cast %96 : vector<4x128xf32> to vector<1x4x128xf32>
    tpu.vector_store %arg7[%c0_39, %c0_40, %c0_41], %99 {strides = array<i32>} : memref<1x4x128xf32, #tpu.memory_space<vmem>>, vector<1x4x128xf32>,
    return
  }
  func.func @transform_0(%arg0: i32) -> (i32, i32, i32) {
    %c0_i32 = arith.constant 0 : i32
    %c0_i32_0 = arith.constant 0 : i32
    %c0_i32_1 = arith.constant 0 : i32
    return %arg0, %c0_i32, %c0_i32_0 : i32, i32, i32
  }
  func.func @transform_1(%arg0: i32) -> (i32, i32, i32) {
    %c0_i32 = arith.constant 0 : i32
    %c0_i32_0 = arith.constant 0 : i32
    %c0_i32_1 = arith.constant 0 : i32
    return %arg0, %c0_i32, %c0_i32_0 : i32, i32, i32
  }
  func.func @transform_2(%arg0: i32) -> (i32, i32, i32) {
    %c0_i32 = arith.constant 0 : i32
    %c0_i32_0 = arith.constant 0 : i32
    %c0_i32_1 = arith.constant 0 : i32
    return %arg0, %c0_i32, %c0_i32_0 : i32, i32, i32
  }
  func.func @transform_3(%arg0: i32) -> (i32, i32, i32) {
    %c0_i32 = arith.constant 0 : i32
    %c0_i32_0 = arith.constant 0 : i32
    %c0_i32_1 = arith.constant 0 : i32
    return %arg0, %c0_i32, %c0_i32_0 : i32, i32, i32
  }
  func.func @transform_4(%arg0: i32) -> (i32, i32, i32) {
    %c0_i32 = arith.constant 0 : i32
    %c0_i32_0 = arith.constant 0 : i32
    %c0_i32_1 = arith.constant 0 : i32
    return %arg0, %c0_i32, %c0_i32_0 : i32, i32, i32
  }
  func.func @transform_5(%arg0: i32) -> (i32, i32, i32) {
    %c0_i32 = arith.constant 0 : i32
    %c0_i32_0 = arith.constant 0 : i32
    %c0_i32_1 = arith.constant 0 : i32
    return %arg0, %c0_i32, %c0_i32_0 : i32, i32, i32
  }
  func.func @transform_6(%arg0: i32) -> (i32, i32, i32) {
    %c0_i32 = arith.constant 0 : i32
    %c0_i32_0 = arith.constant 0 : i32
    %c0_i32_1 = arith.constant 0 : i32
    return %arg0, %c0_i32, %c0_i32_0 : i32, i32, i32
  }
}

</mosaic_0001>

<llo_original>
// kernel: tpu_custom_call.1
$region0: #{tpu_custom_call.1}
  #allocation0 [shape = 'u32[]', space=smem, size = 0x4, offset = 0x4, fixed_abs, tag = 'smem constant byte address 0x4 - core index']
  #allocation1 [shape = 'u32[144,128]{1,0:T(1,128)}', space=vmem, size = 0x12000, scoped, tag = 'internal scratch']
  %s0 = inlined_call_operand.hbm [shape: f32[3,4,32], index: 0, kind: input, shape index: {}]
  %s1 = inlined_call_operand.hbm [shape: f32[3,32,64], index: 1, kind: input, shape index: {}]
  %s2 = inlined_call_operand.hbm [shape: f32[3,3,64], index: 2, kind: input, shape index: {}]
  %s3 = inlined_call_operand.hbm [shape: f32[3,64,64], index: 3, kind: input, shape index: {}]
  %s4 = inlined_call_operand.vmem [shape: f32[3,3,64], index: 4, kind: input, shape index: {}]
  %s5 = inlined_call_operand.hbm [shape: f32[3,65,128], index: 5, kind: input, shape index: {}]
  %s6 = inlined_call_operand.hbm [shape: f32[3,4,128], index: 6, kind: output, shape index: {}]
  %s7 = sld [smem:[#allocation0]]
  $region77: #{tpu_custom_call.1} parent=0
    _
  %s9 = ssub.s32 1, %s7
  %s10 = scalar_select 0, %s9, %s7
  $region1: #{tpu_custom_call.1} parent=0
    #allocation2 [shape = 'u8[4096]{0}', space=vmem, size = 0x1000, scoped, tag = 'input window, operand 0']
    #allocation3 [shape = 's32[2]{0}', space=sflag, size = 0x8, scoped, tag = 'scoped memory for tpu_custom_call.1']
    #allocation4 [shape = 's32[2]{0}', space=sflag, size = 0x8, scoped, tag = 'scoped memory for tpu_custom_call.1']
    #allocation5 [shape = 'u8[32768]{0}', space=vmem, size = 0x8000, scoped, tag = 'input window, operand 1']
    #allocation6 [shape = 's32[2]{0}', space=sflag, size = 0x8, scoped, tag = 'scoped memory for tpu_custom_call.1']
    #allocation7 [shape = 'u8[4096]{0}', space=vmem, size = 0x1000, scoped, tag = 'input window, operand 2']
    #allocation8 [shape = 'u8[65536]{0}', space=vmem, size = 0x10000, scoped, tag = 'input window, operand 3']
    #allocation9 [shape = 's32[2]{0}', space=sflag, size = 0x8, scoped, tag = 'scoped memory for tpu_custom_call.1']
    #allocation10 [shape = 'u8[73728]{0}', space=vmem, size = 0x12000, scoped, tag = 'input window, operand 5']
    #allocation11 [shape = 'u8[4096]{0}', space=vmem, size = 0x1000, scoped, tag = 'output window, operand 0']
    %11 = vsyncpa [#allocation3], 0
    %s12 = scalar_lea.sflag [#allocation3], 1
    %13 = vsyncpa %s12, 0
    %14 = vsyncpa [#allocation6], 0
    %s15 = scalar_lea.sflag [#allocation6], 1
    %16 = vsyncpa %s15, 0
    %17 = vsyncpa [#allocation9], 0
    %s18 = scalar_lea.sflag [#allocation9], 1
    %19 = vsyncpa %s18, 0
    %20 = vsyncpa [#allocation4], 0
    %s21 = scalar_lea.sflag [#allocation4], 1
    %22 = vsyncpa %s21, 0
    loop: start=0, step=1, limit=5
    $region2: #{tpu_custom_call.1} parent=1 // loop_pre_header
      _
    $region3: #{tpu_custom_call.1} parent=1 // loop_header
      %s24 = sphi 0, %s28
      %p25 = scmp.ge.s32.totalorder %s24, 5
      %s34 = sphi 0, %s36
      %s37 = sphi 0, %s34
      %s38 = sphi 0, %s37
      %s54 = sphi 0, %s38
      %s60 = sphi 0, %s62
      %s63 = sphi 0, %s60
      %s64 = sphi 0, %s63
      %s80 = sphi 0, %s64
      %s86 = sphi 0, %s88
      %s89 = sphi 0, %s86
      %s90 = sphi 0, %s89
      %s106 = sphi 0, %s90
      %s112 = sphi 0, %s114
      %s115 = sphi 0, %s112
      %s116 = sphi 0, %s115
      %s132 = sphi 0, %s116
      %s138 = sphi 0, %s140
      %s141 = sphi 0, %s138
      %s142 = sphi 0, %s141
      %s158 = sphi 0, %s142
      %s164 = sphi 0, %s166
      %s167 = sphi 0, %s164
      %s168 = sphi 0, %s167
      %s184 = sphi 0, %s168
      %s190 = sphi 0, %s192
      %s193 = sphi 0, %s190
      %s194 = sphi 0, %s193
      %s210 = sphi 0, %s194
    $region4: #{tpu_custom_call.1} parent=1 // loop_header_branch
      %27 = sbr.rel (%p25) target = $region8
    $region5: #{tpu_custom_call.1} parent=1 // loop_body
      %s29 = ssub.s32 %s24, 1
      %s30 = ssub.s32 %s24, 2
      %s31 = sadd.s32 %s24, 1
      %s32 = ssub.s32 %s24, %s31
      %p33 = scmp.eq.s32.totalorder %s32, 0
      %s35 = sadd.s32 %s34, 1
      %s36 = scalar_select %p33, %s34, %s35
      %p39 = pneg %p33
      %p40 = scmp.eq.s32.totalorder %s24, 2
      %p41 = por %p39, %p40
      %p42 = scmp.ne.s32.totalorder %s34, %s37
      %p43 = scmp.eq.s32.totalorder %s24, 0
      %p44 = por %p42, %p43
      %p45 = scmp.ne.s32.totalorder %s34, %s37
      %p46 = scmp.eq.s32.totalorder %s29, 2
      %p47 = por %p45, %p46
      %p48 = scmp.ne.s32.totalorder %s37, %s38
      %p49 = scmp.eq.s32.totalorder %s29, 0
      %p50 = por %p48, %p49
      %p51 = scmp.ne.s32.totalorder %s37, %s38
      %p52 = scmp.eq.s32.totalorder %s30, 2
      %p53 = por %p51, %p52
      %p55 = scmp.ne.s32.totalorder %s38, %s54
      %p56 = scmp.eq.s32.totalorder %s30, 0
      %p57 = por %p55, %p56
      %s58 = ssub.s32 %s24, %s31
      %p59 = scmp.eq.s32.totalorder %s58, 0
      %s61 = sadd.s32 %s60, 1
      %s62 = scalar_select %p59, %s60, %s61
      %p65 = pneg %p59
      %p66 = scmp.eq.s32.totalorder %s24, 2
      %p67 = por %p65, %p66
      %p68 = scmp.ne.s32.totalorder %s60, %s63
      %p69 = scmp.eq.s32.totalorder %s24, 0
      %p70 = por %p68, %p69
      %p71 = scmp.ne.s32.totalorder %s60, %s63
      %p72 = scmp.eq.s32.totalorder %s29, 2
      %p73 = por %p71, %p72
      %p74 = scmp.ne.s32.totalorder %s63, %s64
      %p75 = scmp.eq.s32.totalorder %s29, 0
      %p76 = por %p74, %p75
      %p77 = scmp.ne.s32.totalorder %s63, %s64
      %p78 = scmp.eq.s32.totalorder %s30, 2
      %p79 = por %p77, %p78
      %p81 = scmp.ne.s32.totalorder %s64, %s80
      %p82 = scmp.eq.s32.totalorder %s30, 0
      %p83 = por %p81, %p82
      %s84 = ssub.s32 %s24, %s31
      %p85 = scmp.eq.s32.totalorder %s84, 0
      %s87 = sadd.s32 %s86, 1
      %s88 = scalar_select %p85, %s86, %s87
      %p91 = pneg %p85
      %p92 = scmp.eq.s32.totalorder %s24, 2
      %p93 = por %p91, %p92
      %p94 = scmp.ne.s32.totalorder %s86, %s89
      %p95 = scmp.eq.s32.totalorder %s24, 0
      %p96 = por %p94, %p95
      %p97 = scmp.ne.s32.totalorder %s86, %s89
      %p98 = scmp.eq.s32.totalorder %s29, 2
      %p99 = por %p97, %p98
      %p100 = scmp.ne.s32.totalorder %s89, %s90
      %p101 = scmp.eq.s32.totalorder %s29, 0
      %p102 = por %p100, %p101
      %p103 = scmp.ne.s32.totalorder %s89, %s90
      %p104 = scmp.eq.s32.totalorder %s30, 2
      %p105 = por %p103, %p104
      %p107 = scmp.ne.s32.totalorder %s90, %s106
      %p108 = scmp.eq.s32.totalorder %s30, 0
      %p109 = por %p107, %p108
      %s110 = ssub.s32 %s24, %s31
      %p111 = scmp.eq.s32.totalorder %s110, 0
      %s113 = sadd.s32 %s112, 1
      %s114 = scalar_select %p111, %s112, %s113
      %p117 = pneg %p111
      %p118 = scmp.eq.s32.totalorder %s24, 2
      %p119 = por %p117, %p118
      %p120 = scmp.ne.s32.totalorder %s112, %s115
      %p121 = scmp.eq.s32.totalorder %s24, 0
      %p122 = por %p120, %p121
      %p123 = scmp.ne.s32.totalorder %s112, %s115
      %p124 = scmp.eq.s32.totalorder %s29, 2
      %p125 = por %p123, %p124
      %p126 = scmp.ne.s32.totalorder %s115, %s116
      %p127 = scmp.eq.s32.totalorder %s29, 0
      %p128 = por %p126, %p127
      %p129 = scmp.ne.s32.totalorder %s115, %s116
      %p130 = scmp.eq.s32.totalorder %s30, 2
      %p131 = por %p129, %p130
      %p133 = scmp.ne.s32.totalorder %s116, %s132
      %p134 = scmp.eq.s32.totalorder %s30, 0
      %p135 = por %p133, %p134
      %s136 = ssub.s32 %s24, %s31
      %p137 = scmp.eq.s32.totalorder %s136, 0
      %s139 = sadd.s32 %s138, 1
      %s140 = scalar_select %p137, %s138, %s139
      %p143 = pneg %p137
      %p144 = scmp.eq.s32.totalorder %s24, 2
      %p145 = por %p143, %p144
      %p146 = scmp.ne.s32.totalorder %s138, %s141
      %p147 = scmp.eq.s32.totalorder %s24, 0
      %p148 = por %p146, %p147
      %p149 = scmp.ne.s32.totalorder %s138, %s141
      %p150 = scmp.eq.s32.totalorder %s29, 2
      %p151 = por %p149, %p150
      %p152 = scmp.ne.s32.totalorder %s141, %s142
      %p153 = scmp.eq.s32.totalorder %s29, 0
      %p154 = por %p152, %p153
      %p155 = scmp.ne.s32.totalorder %s141, %s142
      %p156 = scmp.eq.s32.totalorder %s30, 2
      %p157 = por %p155, %p156
      %p159 = scmp.ne.s32.totalorder %s142, %s158
      %p160 = scmp.eq.s32.totalorder %s30, 0
      %p161 = por %p159, %p160
      %s162 = ssub.s32 %s24, %s31
      %p163 = scmp.eq.s32.totalorder %s162, 0
      %s165 = sadd.s32 %s164, 1
      %s166 = scalar_select %p163, %s164, %s165
      %p169 = pneg %p163
      %p170 = scmp.eq.s32.totalorder %s24, 2
      %p171 = por %p169, %p170
      %p172 = scmp.ne.s32.totalorder %s164, %s167
      %p173 = scmp.eq.s32.totalorder %s24, 0
      %p174 = por %p172, %p173
      %p175 = scmp.ne.s32.totalorder %s164, %s167
      %p176 = scmp.eq.s32.totalorder %s29, 2
      %p177 = por %p175, %p176
      %p178 = scmp.ne.s32.totalorder %s167, %s168
      %p179 = scmp.eq.s32.totalorder %s29, 0
      %p180 = por %p178, %p179
      %p181 = scmp.ne.s32.totalorder %s167, %s168
      %p182 = scmp.eq.s32.totalorder %s30, 2
      %p183 = por %p181, %p182
      %p185 = scmp.ne.s32.totalorder %s168, %s184
      %p186 = scmp.eq.s32.totalorder %s30, 0
      %p187 = por %p185, %p186
      %s188 = ssub.s32 %s24, %s31
      %p189 = scmp.eq.s32.totalorder %s188, 0
      %s191 = sadd.s32 %s190, 1
      %s192 = scalar_select %p189, %s190, %s191
      %p195 = pneg %p189
      %p196 = scmp.eq.s32.totalorder %s24, 2
      %p197 = por %p195, %p196
      %p198 = scmp.ne.s32.totalorder %s190, %s193
      %p199 = scmp.eq.s32.totalorder %s24, 0
      %p200 = por %p198, %p199
      %p201 = scmp.ne.s32.totalorder %s190, %s193
      %p202 = scmp.eq.s32.totalorder %s29, 2
      %p203 = por %p201, %p202
      %p204 = scmp.ne.s32.totalorder %s193, %s194
      %p205 = scmp.eq.s32.totalorder %s29, 0
      %p206 = por %p204, %p205
      %p207 = scmp.ne.s32.totalorder %s193, %s194
      %p208 = scmp.eq.s32.totalorder %s30, 2
      %p209 = por %p207, %p208
      %p211 = scmp.ne.s32.totalorder %s194, %s210
      %p212 = scmp.eq.s32.totalorder %s30, 0
      %p213 = por %p211, %p212
      %p214 = scmp.le.s32.totalorder 1, %s24
      %p215 = scmp.lt.s32.totalorder %s24, 4
      %p216 = pnand %p214, %p215
      %p217 = pneg %p216
      // Predicated region
      $region9: #{tpu_custom_call.1} parent=5 // pred_check
        _
      $region10: #{tpu_custom_call.1} parent=5 // pred_check_branch
        %219 = sbr.rel (%p216) target = $region12
      $region11: #{tpu_custom_call.1} parent=5 // pred_region
        %s220 = ssub.s32 %s24, 1
      $region12: #{tpu_custom_call.1} parent=5 // pred_fallthru
        _
      %p221 = scmp.lt.s32.totalorder %s24, 3
      // Predicated region
      $region13: #{tpu_custom_call.1} parent=5 // pred_check
        %p222 = pneg %p221
      $region14: #{tpu_custom_call.1} parent=5 // pred_check_branch
        %224 = sbr.rel (%p222) target = $region16
      $region15: #{tpu_custom_call.1} parent=5 // pred_region
        // Predicated region
        $region17: #{tpu_custom_call.1} parent=15 // pred_check
          %p225 = pneg %p44
        $region18: #{tpu_custom_call.1} parent=15 // pred_check_branch
          %227 = sbr.rel (%p225) target = $region20
        $region19: #{tpu_custom_call.1} parent=15 // pred_region
          %s228 = sand.u32 %s34, 1
          %s229 = scalar_lea.sflag [#allocation3], %s228
          %s230 = sand.u32 %s34, 1
          %s231 = smul.addr %s230, 4
          %s232 = scalar_lea.vmem [#allocation2], %s231
          %s234 = ssub.s32 64, 64
          %235 = vsyncadd %s229, %s234
          %s236 = smul.addr %s24, 64
          %s237 = scalar_lea.hbm %s0, %s236
          %s239 = sshll.u32 %s232, 4
          %s240 = int_to_ptr.vmem [resolvable:$true] %s239
          %242 = dma.hbm_to_vmem [thread:$0]  %s237, 64, %s240, %s229
        $region20: #{tpu_custom_call.1} parent=15 // pred_fallthru
          _
        // Predicated region
        $region21: #{tpu_custom_call.1} parent=15 // pred_check
          %p243 = pneg %p70
        $region22: #{tpu_custom_call.1} parent=15 // pred_check_branch
          %245 = sbr.rel (%p243) target = $region24
        $region23: #{tpu_custom_call.1} parent=15 // pred_region
          %s246 = sand.u32 %s24, 1
          %s247 = scalar_lea.sflag [#allocation6], %s246
          %s248 = sand.u32 %s60, 1
          %s249 = smul.addr %s248, 32
          %s250 = scalar_lea.vmem [#allocation5], %s249
          %s252 = ssub.s32 512, 512
          %253 = vsyncadd %s247, %s252
          %s254 = smul.addr %s24, 4
          %s255 = smul.addr %s254, 128
          %s256 = scalar_lea.hbm %s1, %s255
          %s257 = sshll.u32 %s250, 4
          %s258 = int_to_ptr.vmem [resolvable:$true] %s257
          %263 = dma.hbm_to_vmem [thread:$0]  %s256, 512, %s258, %s247, 128, 128, 8
        $region24: #{tpu_custom_call.1} parent=15 // pred_fallthru
          _
        // Predicated region
        $region25: #{tpu_custom_call.1} parent=15 // pred_check
          %p264 = pneg %p96
        $region26: #{tpu_custom_call.1} parent=15 // pred_check_branch
          %266 = sbr.rel (%p264) target = $region28
        $region27: #{tpu_custom_call.1} parent=15 // pred_region
          %s267 = sand.u32 %s24, 1
          %s268 = scalar_lea.sflag [#allocation6], %s267
          %s269 = sand.u32 %s86, 1
          %s270 = smul.addr %s269, 4
          %s271 = scalar_lea.vmem [#allocation7], %s270
          %s273 = ssub.s32 64, 64
          %274 = vsyncadd %s268, %s273
          %s275 = smul.addr %s24, 64
          %s276 = scalar_lea.hbm %s2, %s275
          %s278 = sshll.u32 %s271, 4
          %s279 = int_to_ptr.vmem [resolvable:$true] %s278
          %281 = dma.hbm_to_vmem [thread:$0]  %s276, 64, %s279, %s268
        $region28: #{tpu_custom_call.1} parent=15 // pred_fallthru
          _
        // Predicated region
        $region29: #{tpu_custom_call.1} parent=15 // pred_check
          %p282 = pneg %p122
        $region30: #{tpu_custom_call.1} parent=15 // pred_check_branch
          %284 = sbr.rel (%p282) target = $region32
        $region31: #{tpu_custom_call.1} parent=15 // pred_region
          %s285 = sand.u32 %s24, 1
          %s286 = scalar_lea.sflag [#allocation9], %s285
          %s287 = sand.u32 %s112, 1
          %s288 = smul.addr %s287, 64
          %s289 = scalar_lea.vmem [#allocation8], %s288
          %s291 = ssub.s32 1024, 1024
          %292 = vsyncadd %s286, %s291
          %s293 = smul.addr %s24, 8
          %s294 = smul.addr %s293, 128
          %s295 = scalar_lea.hbm %s3, %s294
          %s296 = sshll.u32 %s289, 4
          %s297 = int_to_ptr.vmem [resolvable:$true] %s296
          %302 = dma.hbm_to_vmem [thread:$0]  %s295, 1024, %s297, %s286, 128, 128, 8
        $region32: #{tpu_custom_call.1} parent=15 // pred_fallthru
          _
        // Predicated region
        $region33: #{tpu_custom_call.1} parent=15 // pred_check
          %p303 = pneg %p148
        $region34: #{tpu_custom_call.1} parent=15 // pred_check_branch
          %305 = sbr.rel (%p303) target = $region36
        $region35: #{tpu_custom_call.1} parent=15 // pred_region
          %p306 = scmp.lt.s32.totalorder %s24, 2
          %s307 = scalar_select %p306, %s24, 2
          %s308 = smul.addr %s307, 4
          %s309 = scalar_lea.vmem %s4, %s308
        $region36: #{tpu_custom_call.1} parent=15 // pred_fallthru
          _
        // Predicated region
        $region37: #{tpu_custom_call.1} parent=15 // pred_check
          %p310 = pneg %p174
        $region38: #{tpu_custom_call.1} parent=15 // pred_check_branch
          %312 = sbr.rel (%p310) target = $region40
        $region39: #{tpu_custom_call.1} parent=15 // pred_region
          %s313 = sand.u32 %s24, 1
          %s314 = scalar_lea.sflag [#allocation9], %s313
          %s315 = sand.u32 %s164, 1
          %s316 = smul.addr %s315, 72
          %s317 = scalar_lea.vmem [#allocation10], %s316
          %s319 = ssub.s32 1152, 1152
          %320 = vsyncadd %s314, %s319
          %s321 = smul.addr %s24, 9
          %s322 = smul.addr %s321, 128
          %s323 = scalar_lea.hbm %s5, %s322
          %s324 = sshll.u32 %s317, 4
          %s325 = int_to_ptr.vmem [resolvable:$true] %s324
          %330 = dma.hbm_to_vmem [thread:$0]  %s323, 1152, %s325, %s314, 128, 128, 8
        $region40: #{tpu_custom_call.1} parent=15 // pred_fallthru
          _
      $region16: #{tpu_custom_call.1} parent=5 // pred_fallthru
        _
      %p331 = scmp.le.s32.totalorder 1, %s24
      %p332 = scmp.lt.s32.totalorder %s24, 4
      %p333 = pnand %p331, %p332
      %p334 = pneg %p333
      // Predicated region
      $region41: #{tpu_custom_call.1} parent=5 // pred_check
        _
      $region42: #{tpu_custom_call.1} parent=5 // pred_check_branch
        %336 = sbr.rel (%p333) target = $region44
      $region43: #{tpu_custom_call.1} parent=5 // pred_region
        %s337 = ssub.s32 %s24, 1
        %s338 = sand.u32 %s37, 1
        %s339 = scalar_lea.sflag [#allocation3], %s338
        %s340 = sand.u32 %s37, 1
        %s341 = smul.addr %s340, 4
        %s342 = scalar_lea.vmem [#allocation2], %s341
        // Predicated region
        $region45: #{tpu_custom_call.1} parent=43 // pred_check
          %p343 = pneg %p50
        $region46: #{tpu_custom_call.1} parent=43 // pred_check_branch
          %345 = sbr.rel (%p343) target = $region48
        $region47: #{tpu_custom_call.1} parent=43 // pred_region
          %346 = dma.done %s339, 64
        $region48: #{tpu_custom_call.1} parent=43 // pred_fallthru
          _
        %s347 = sand.u32 %s29, 1
        %s348 = scalar_lea.sflag [#allocation6], %s347
        %s349 = sand.u32 %s63, 1
        %s350 = smul.addr %s349, 32
        %s351 = scalar_lea.vmem [#allocation5], %s350
        // Predicated region
        $region49: #{tpu_custom_call.1} parent=43 // pred_check
          %p352 = pneg %p76
        $region50: #{tpu_custom_call.1} parent=43 // pred_check_branch
          %354 = sbr.rel (%p352) target = $region52
        $region51: #{tpu_custom_call.1} parent=43 // pred_region
          %355 = dma.done %s348, 512
        $region52: #{tpu_custom_call.1} parent=43 // pred_fallthru
          _
        %s356 = sand.u32 %s29, 1
        %s357 = scalar_lea.sflag [#allocation6], %s356
        %s358 = sand.u32 %s89, 1
        %s359 = smul.addr %s358, 4
        %s360 = scalar_lea.vmem [#allocation7], %s359
        // Predicated region
        $region53: #{tpu_custom_call.1} parent=43 // pred_check
          %p361 = pneg %p102
        $region54: #{tpu_custom_call.1} parent=43 // pred_check_branch
          %363 = sbr.rel (%p361) target = $region56
        $region55: #{tpu_custom_call.1} parent=43 // pred_region
          %364 = dma.done %s357, 64
        $region56: #{tpu_custom_call.1} parent=43 // pred_fallthru
          _
        %s365 = sand.u32 %s29, 1
        %s366 = scalar_lea.sflag [#allocation9], %s365
        %s367 = sand.u32 %s115, 1
        %s368 = smul.addr %s367, 64
        %s369 = scalar_lea.vmem [#allocation8], %s368
        // Predicated region
        $region57: #{tpu_custom_call.1} parent=43 // pred_check
          %p370 = pneg %p128
        $region58: #{tpu_custom_call.1} parent=43 // pred_check_branch
          %372 = sbr.rel (%p370) target = $region60
        $region59: #{tpu_custom_call.1} parent=43 // pred_region
          %373 = dma.done %s366, 1024
        $region60: #{tpu_custom_call.1} parent=43 // pred_fallthru
          _
        %s374 = sand.u32 %s29, 1
        %s375 = scalar_lea.sflag [#allocation9], %s374
        %s376 = sand.u32 %s167, 1
        %s377 = smul.addr %s376, 72
        %s378 = scalar_lea.vmem [#allocation10], %s377
        // Predicated region
        $region61: #{tpu_custom_call.1} parent=43 // pred_check
          %p379 = pneg %p180
        $region62: #{tpu_custom_call.1} parent=43 // pred_check_branch
          %381 = sbr.rel (%p379) target = $region64
        $region63: #{tpu_custom_call.1} parent=43 // pred_region
          %382 = dma.done %s375, 1152
        $region64: #{tpu_custom_call.1} parent=43 // pred_fallthru
          _
        %s383 = sand.u32 %s37, 1
        %s384 = scalar_lea.sflag [#allocation3], %s383
        %s385 = sand.u32 %s37, 1
        %s386 = smul.addr %s385, 4
        %s387 = scalar_lea.vmem [#allocation2], %s386
        %p388 = pneg %p50
        %p389 = pneg %p47
        %s390 = sand.u32 %s29, 1
        %s391 = scalar_lea.sflag [#allocation6], %s390
        %s392 = sand.u32 %s63, 1
        %s393 = smul.addr %s392, 32
        %s394 = scalar_lea.vmem [#allocation5], %s393
        %p395 = pneg %p76
        %p396 = pneg %p73
        %s397 = sand.u32 %s29, 1
        %s398 = scalar_lea.sflag [#allocation6], %s397
        %s399 = sand.u32 %s89, 1
        %s400 = smul.addr %s399, 4
        %s401 = scalar_lea.vmem [#allocation7], %s400
        %p402 = pneg %p102
        %p403 = pneg %p99
        %s404 = sand.u32 %s29, 1
        %s405 = scalar_lea.sflag [#allocation9], %s404
        %s406 = sand.u32 %s115, 1
        %s407 = smul.addr %s406, 64
        %s408 = scalar_lea.vmem [#allocation8], %s407
        %p409 = pneg %p128
        %p410 = pneg %p125
        %p411 = scmp.lt.s32.totalorder %s29, 2
        %s412 = scalar_select %p411, %s29, 2
        %s413 = smul.addr %s412, 4
        %s414 = scalar_lea.vmem %s4, %s413
        %p415 = pneg %p154
        %p416 = pneg %p151
        %s417 = sand.u32 %s29, 1
        %s418 = scalar_lea.sflag [#allocation9], %s417
        %s419 = sand.u32 %s167, 1
        %s420 = smul.addr %s419, 72
        %s421 = scalar_lea.vmem [#allocation10], %s420
        %p422 = pneg %p180
        %p423 = pneg %p177
        %p424 = pneg %p206
        %p425 = pneg %p203
        %s426 = sand.u32 %s193, 1
        %s427 = scalar_lea.sflag [#allocation4], %s426
        %s428 = sand.u32 %s193, 1
        %s429 = smul.addr %s428, 4
        %s430 = scalar_lea.vmem [#allocation11], %s429
        %p431 = scmp.lt.s32.totalorder %s29, 2
        %s432 = scalar_select %p431, %s29, 2
        %s433 = smul.addr %s432, 4
        %s434 = scalar_lea.vmem %s4, %s433
        %v435 = vld [vmem:[%s342] sm:$0xf]
        %v436 = vld [vmem:[%s360] sm:$0x7]
        %v437 = vld [vmem:[%s351] sm:$0xff]
        %v438 = vld [vmem:[%s351 + $0x8] sm:$0xff]
        %v439 = vld [vmem:[%s351 + $0x10] sm:$0xff]
        %v440 = vld [vmem:[%s351 + $0x18] sm:$0xff]
        %v441 = vlaneseq
        %v442 = vshrl.u32 %v441, 7
        %v443 = vsub.s32 0, %v442
        %v444 = vrot.slane %v436, %v443
        %vm445 = vcmask 261120
        %v447 = vsel %vm445, %v435, 0
        %449 = vmatprep.subr.mxu0 0.0
        %450 = vmatpush1.msra.mxu0 %v437
        %451 = vmatprep.subr.mxu0 0.0
        %452 = vmatpush1.msra.mxu0 %v438
        %453 = vmatprep.subr.mxu0 0.0
        %454 = vmatpush1.msra.mxu0 %v439
        %455 = vmatprep.subr.mxu0 0.0
        %456 = vmatpush1.msra.mxu0 %v440
        %457 = vmatprep.subr.mxu0 0.0
        %458 = vmatpush1.msra.mxu0 0.0
        %459 = vmatprep.subr.mxu0 0.0
        %460 = vmatpush1.msra.mxu0 0.0
        %461 = vmatprep.subr.mxu0 0.0
        %462 = vmatpush1.msra.mxu0 0.0
        %463 = vmatprep.subr.mxu0 0.0
        %464 = vmatpush1.msra.mxu0 0.0
        %465 = vmatprep.subr.mxu0 0.0
        %466 = vmatpush1.msra.mxu0 0.0
        %467 = vmatprep.subr.mxu0 0.0
        %468 = vmatpush1.msra.mxu0 0.0
        %469 = vmatprep.subr.mxu0 0.0
        %470 = vmatpush1.msra.mxu0 0.0
        %471 = vmatprep.subr.mxu0 0.0
        %472 = vmatpush1.msra.mxu0 0.0
        %473 = vmatprep.subr.mxu0 0.0
        %474 = vmatpush1.msra.mxu0 0.0
        %475 = vmatprep.subr.mxu0 0.0
        %476 = vmatpush1.msra.mxu0 0.0
        %477 = vmatprep.subr.mxu0 0.0
        %478 = vmatpush1.msra.mxu0 0.0
        %479 = vmatprep.subr.mxu0 0.0
        %480 = vmatpush1.msra.mxu0 0.0
        %481 = vmatprep.subr.mxu0 0.0
        %482 = vmatpush1.msra.mxu0 0.0
        %483 = vmatprep.subr.mxu0 0.0
        %484 = vmatpush1.msra.mxu0 0.0
        %485 = vmatprep.subr.mxu0 0.0
        %486 = vmatpush1.msra.mxu0 0.0
        %487 = vmatprep.subr.mxu0 0.0
        %488 = vmatpush1.msra.mxu0 0.0
        %489 = vmatprep.subr.mxu0 0.0
        %490 = vmatpush1.msra.mxu0 0.0
        %491 = vmatprep.subr.mxu0 0.0
        %492 = vmatpush1.msra.mxu0 0.0
        %493 = vmatprep.subr.mxu0 0.0
        %494 = vmatpush1.msra.mxu0 0.0
        %495 = vmatprep.subr.mxu0 0.0
        %496 = vmatpush1.msra.mxu0 0.0
        %497 = vmatprep.subr.mxu0 0.0
        %498 = vmatpush1.msra.mxu0 0.0
        %499 = vmatprep.subr.mxu0 0.0
        %500 = vmatpush1.msra.mxu0 0.0
        %501 = vmatprep.subr.mxu0 0.0
        %502 = vmatpush1.msra.mxu0 0.0
        %503 = vmatprep.subr.mxu0 0.0
        %504 = vmatpush1.msra.mxu0 0.0
        %505 = vmatprep.subr.mxu0 0.0
        %506 = vmatpush1.msra.mxu0 0.0
        %507 = vmatprep.subr.mxu0 0.0
        %508 = vmatpush1.msra.mxu0 0.0
        %509 = vmatprep.subr.mxu0 0.0
        %510 = vmatpush1.msra.mxu0 0.0
        %511 = vmatprep.subr.mxu0 0.0
        %512 = vmatpush1.msra.mxu0 0.0
        %513 = vmatprep.mubr.f32.mxu0 0.0
        %514 = vmatmul.mubr.f32.gmra.mrb[0].mxu0 %v447
        %v515 = vpop.f32.mrb[0].mxu0
        %v516 = vadd.f32 %v444, %v515
        %v517 = vpop.f32.mrb[0].mxu0
        %518 = vdwg.mxu0
        %vm519 = vcmask 519168
        %v520 = vsel %vm519, %v516, 0.0
        %521 = vadd.xlane.f32.xlu0 %v520
        %v522 = vpop.xlane.xlu0 %521
        %v523 = vrcp.pop 64.0
        %v524 = vmul.f32 %v522, %v523
        %v525 = vmul.f32 %v516, %v516
        %v526 = vsel %vm519, %v525, 0.0
        %527 = vadd.xlane.f32.xlu0 %v526
        %v528 = vpop.xlane.xlu0 %527
        %v529 = vmul.f32 %v528, %v523
        %v530 = vmul.f32 %v524, %v524
        %v531 = vsub.f32 %v529, %v530
        %v532 = vmax.f32 %v531, 0.0
        %v533 = vsub.f32 %v516, %v524
        %v534 = vadd.f32 %v532, 1e-05
        %v535 = vrsqrt.pop %v534
        %v536 = vmul.f32 %v533, %v535
        %v537 = vlaneseq
        %v538 = vshrl.u32 %v537, 7
        %v539 = vsub.s32 1, %v538
        %v540 = vrot.slane %v436, %v539
        %v541 = vmul.f32 %v536, %v540
        %v542 = vlaneseq
        %v543 = vshrl.u32 %v542, 7
        %v544 = vsub.s32 2, %v543
        %v545 = vrot.slane %v436, %v544
        %v546 = vadd.f32 %v541, %v545
        %v547 = vmin.f32 %v546, 20.0
        %v548 = vmul.f32 %v547, 1.442695
        %v549 = vpow.pop %v548
        %v550 = vadd.f32 %v549, 2.0
        %v551 = vmul.f32 %v549, %v550
        %v552 = vadd.f32 %v551, 2.0
        %v553 = vrcp.pop %v552
        %v554 = vmul.f32 %v551, %v553
        %v555 = vmul.f32 %v546, %v554
        %v556 = vld [vmem:[%s434] sm:$0x7]
        %v557 = vld [vmem:[%s369] sm:$0xff]
        %v558 = vld [vmem:[%s369 + $0x8] sm:$0xff]
        %v559 = vld [vmem:[%s369 + $0x10] sm:$0xff]
        %v560 = vld [vmem:[%s369 + $0x18] sm:$0xff]
        %v561 = vld [vmem:[%s369 + $0x20] sm:$0xff]
        %v562 = vld [vmem:[%s369 + $0x28] sm:$0xff]
        %v563 = vld [vmem:[%s369 + $0x30] sm:$0xff]
        %v564 = vld [vmem:[%s369 + $0x38] sm:$0xff]
        %v565 = vlaneseq
        %v566 = vshrl.u32 %v565, 7
        %v567 = vsub.s32 0, %v566
        %v568 = vrot.slane %v556, %v567
        %vm569 = vcmask 523264
        %v571 = vsel %vm569, %v555, 0
        %573 = vmatprep.subr.mxu0 0.0
        %574 = vmatpush1.msra.mxu0 %v557
        %575 = vmatprep.subr.mxu0 0.0
        %576 = vmatpush1.msra.mxu0 %v558
        %577 = vmatprep.subr.mxu0 0.0
        %578 = vmatpush1.msra.mxu0 %v559
        %579 = vmatprep.subr.mxu0 0.0
        %580 = vmatpush1.msra.mxu0 %v560
        %581 = vmatprep.subr.mxu0 0.0
        %582 = vmatpush1.msra.mxu0 %v561
        %583 = vmatprep.subr.mxu0 0.0
        %584 = vmatpush1.msra.mxu0 %v562
        %585 = vmatprep.subr.mxu0 0.0
        %586 = vmatpush1.msra.mxu0 %v563
        %587 = vmatprep.subr.mxu0 0.0
        %588 = vmatpush1.msra.mxu0 %v564
        %589 = vmatprep.subr.mxu0 0.0
        %590 = vmatpush1.msra.mxu0 0.0
        %591 = vmatprep.subr.mxu0 0.0
        %592 = vmatpush1.msra.mxu0 0.0
        %593 = vmatprep.subr.mxu0 0.0
        %594 = vmatpush1.msra.mxu0 0.0
        %595 = vmatprep.subr.mxu0 0.0
        %596 = vmatpush1.msra.mxu0 0.0
        %597 = vmatprep.subr.mxu0 0.0
        %598 = vmatpush1.msra.mxu0 0.0
        %599 = vmatprep.subr.mxu0 0.0
        %600 = vmatpush1.msra.mxu0 0.0
        %601 = vmatprep.subr.mxu0 0.0
        %602 = vmatpush1.msra.mxu0 0.0
        %603 = vmatprep.subr.mxu0 0.0
        %604 = vmatpush1.msra.mxu0 0.0
        %605 = vmatprep.subr.mxu0 0.0
        %606 = vmatpush1.msra.mxu0 0.0
        %607 = vmatprep.subr.mxu0 0.0
        %608 = vmatpush1.msra.mxu0 0.0
        %609 = vmatprep.subr.mxu0 0.0
        %610 = vmatpush1.msra.mxu0 0.0
        %611 = vmatprep.subr.mxu0 0.0
        %612 = vmatpush1.msra.mxu0 0.0
        %613 = vmatprep.subr.mxu0 0.0
        %614 = vmatpush1.msra.mxu0 0.0
        %615 = vmatprep.subr.mxu0 0.0
        %616 = vmatpush1.msra.mxu0 0.0
        %617 = vmatprep.subr.mxu0 0.0
        %618 = vmatpush1.msra.mxu0 0.0
        %619 = vmatprep.subr.mxu0 0.0
        %620 = vmatpush1.msra.mxu0 0.0
        %621 = vmatprep.subr.mxu0 0.0
        %622 = vmatpush1.msra.mxu0 0.0
        %623 = vmatprep.subr.mxu0 0.0
        %624 = vmatpush1.msra.mxu0 0.0
        %625 = vmatprep.subr.mxu0 0.0
        %626 = vmatpush1.msra.mxu0 0.0
        %627 = vmatprep.subr.mxu0 0.0
        %628 = vmatpush1.msra.mxu0 0.0
        %629 = vmatprep.subr.mxu0 0.0
        %630 = vmatpush1.msra.mxu0 0.0
        %631 = vmatprep.subr.mxu0 0.0
        %632 = vmatpush1.msra.mxu0 0.0
        %633 = vmatprep.subr.mxu0 0.0
        %634 = vmatpush1.msra.mxu0 0.0
        %635 = vmatprep.subr.mxu0 0.0
        %636 = vmatpush1.msra.mxu0 0.0
        %637 = vmatprep.mubr.f32.mxu0 0.0
        %638 = vmatmul.mubr.f32.gmra.mrb[0].mxu0 %v571
        %v639 = vpop.f32.mrb[0].mxu0
        %v640 = vadd.f32 %v568, %v639
        %v641 = vpop.f32.mrb[0].mxu0
        %642 = vdwg.mxu0
        %v643 = vsel %vm519, %v640, 0.0
        %644 = vadd.xlane.f32.xlu0 %v643
        %v645 = vpop.xlane.xlu0 %644
        %v646 = vmul.f32 %v645, %v523
        %v647 = vmul.f32 %v640, %v640
        %v648 = vsel %vm519, %v647, 0.0
        %649 = vadd.xlane.f32.xlu0 %v648
        %v650 = vpop.xlane.xlu0 %649
        %v651 = vmul.f32 %v650, %v523
        %v652 = vmul.f32 %v646, %v646
        %v653 = vsub.f32 %v651, %v652
        %v654 = vmax.f32 %v653, 0.0
        %v655 = vsub.f32 %v640, %v646
        %v656 = vadd.f32 %v654, 1e-05
        %v657 = vrsqrt.pop %v656
        %v658 = vmul.f32 %v655, %v657
        %v659 = vlaneseq
        %v660 = vshrl.u32 %v659, 7
        %v661 = vsub.s32 1, %v660
        %v662 = vrot.slane %v556, %v661
        %v663 = vmul.f32 %v658, %v662
        %v664 = vlaneseq
        %v665 = vshrl.u32 %v664, 7
        %v666 = vsub.s32 2, %v665
        %v667 = vrot.slane %v556, %v666
        %v668 = vadd.f32 %v663, %v667
        %v669 = vmin.f32 %v668, 20.0
        %v670 = vmul.f32 %v669, 1.442695
        %v671 = vpow.pop %v670
        %v672 = vadd.f32 %v671, 2.0
        %v673 = vmul.f32 %v671, %v672
        %v674 = vadd.f32 %v673, 2.0
        %v675 = vrcp.pop %v674
        %v676 = vmul.f32 %v673, %v675
        %v677 = vmul.f32 %v668, %v676
        %v678 = vld [vmem:[%s378] sm:$0xff]
        %v679 = vld [vmem:[%s378 + $0x8] sm:$0xff]
        %v680 = vld [vmem:[%s378 + $0x10] sm:$0xff]
        %v681 = vld [vmem:[%s378 + $0x18] sm:$0xff]
        %v682 = vld [vmem:[%s378 + $0x20] sm:$0xff]
        %v683 = vld [vmem:[%s378 + $0x28] sm:$0xff]
        %v684 = vld [vmem:[%s378 + $0x30] sm:$0xff]
        %v685 = vld [vmem:[%s378 + $0x38] sm:$0xff]
        %v686 = vld [vmem:[%s378 + $0x40] sm:$0x1]
        %v687 = vlaneseq
        %v688 = vshrl.u32 %v687, 7
        %v689 = vsub.s32 0, %v688
        %v690 = vrot.slane %v686, %v689
        %v692 = vsel %vm569, %v677, 0
        %694 = vmatprep.subr.mxu0 0.0
        %695 = vmatpush1.msra.mxu0 %v678
        %696 = vmatprep.subr.mxu0 0.0
        %697 = vmatpush1.msra.mxu0 %v679
        %698 = vmatprep.subr.mxu0 0.0
        %699 = vmatpush1.msra.mxu0 %v680
        %700 = vmatprep.subr.mxu0 0.0
        %701 = vmatpush1.msra.mxu0 %v681
        %702 = vmatprep.subr.mxu0 0.0
        %703 = vmatpush1.msra.mxu0 %v682
        %704 = vmatprep.subr.mxu0 0.0
        %705 = vmatpush1.msra.mxu0 %v683
        %706 = vmatprep.subr.mxu0 0.0
        %707 = vmatpush1.msra.mxu0 %v684
        %708 = vmatprep.subr.mxu0 0.0
        %709 = vmatpush1.msra.mxu0 %v685
        %710 = vmatprep.subr.mxu0 0.0
        %711 = vmatpush1.msra.mxu0 0.0
        %712 = vmatprep.subr.mxu0 0.0
        %713 = vmatpush1.msra.mxu0 0.0
        %714 = vmatprep.subr.mxu0 0.0
        %715 = vmatpush1.msra.mxu0 0.0
        %716 = vmatprep.subr.mxu0 0.0
        %717 = vmatpush1.msra.mxu0 0.0
        %718 = vmatprep.subr.mxu0 0.0
        %719 = vmatpush1.msra.mxu0 0.0
        %720 = vmatprep.subr.mxu0 0.0
        %721 = vmatpush1.msra.mxu0 0.0
        %722 = vmatprep.subr.mxu0 0.0
        %723 = vmatpush1.msra.mxu0 0.0
        %724 = vmatprep.subr.mxu0 0.0
        %725 = vmatpush1.msra.mxu0 0.0
        %726 = vmatprep.subr.mxu0 0.0
        %727 = vmatpush1.msra.mxu0 0.0
        %728 = vmatprep.subr.mxu0 0.0
        %729 = vmatpush1.msra.mxu0 0.0
        %730 = vmatprep.subr.mxu0 0.0
        %731 = vmatpush1.msra.mxu0 0.0
        %732 = vmatprep.subr.mxu0 0.0
        %733 = vmatpush1.msra.mxu0 0.0
        %734 = vmatprep.subr.mxu0 0.0
        %735 = vmatpush1.msra.mxu0 0.0
        %736 = vmatprep.subr.mxu0 0.0
        %737 = vmatpush1.msra.mxu0 0.0
        %738 = vmatprep.subr.mxu0 0.0
        %739 = vmatpush1.msra.mxu0 0.0
        %740 = vmatprep.subr.mxu0 0.0
        %741 = vmatpush1.msra.mxu0 0.0
        %742 = vmatprep.subr.mxu0 0.0
        %743 = vmatpush1.msra.mxu0 0.0
        %744 = vmatprep.subr.mxu0 0.0
        %745 = vmatpush1.msra.mxu0 0.0
        %746 = vmatprep.subr.mxu0 0.0
        %747 = vmatpush1.msra.mxu0 0.0
        %748 = vmatprep.subr.mxu0 0.0
        %749 = vmatpush1.msra.mxu0 0.0
        %750 = vmatprep.subr.mxu0 0.0
        %751 = vmatpush1.msra.mxu0 0.0
        %752 = vmatprep.subr.mxu0 0.0
        %753 = vmatpush1.msra.mxu0 0.0
        %754 = vmatprep.subr.mxu0 0.0
        %755 = vmatpush1.msra.mxu0 0.0
        %756 = vmatprep.subr.mxu0 0.0
        %757 = vmatpush1.msra.mxu0 0.0
        %758 = vmatprep.mubr.f32.mxu0 0.0
        %759 = vmatmul.mubr.f32.gmra.mrb[0].mxu0 %v692
        %v760 = vpop.f32.mrb[0].mxu0
        %v761 = vadd.f32 %v690, %v760
        %v762 = vpop.f32.mrb[0].mxu0
        %763 = vdwg.mxu0
        %764 = vst [vmem:[%s430] sm:$0xf] %v761
        %s765 = sand.u32 %s193, 1
        %s766 = scalar_lea.sflag [#allocation4], %s765
        %s767 = sand.u32 %s193, 1
        %s768 = smul.addr %s767, 4
        %s769 = scalar_lea.vmem [#allocation11], %s768
        // Predicated region
        $region65: #{tpu_custom_call.1} parent=43 // pred_check
          %p770 = pneg %p203
        $region66: #{tpu_custom_call.1} parent=43 // pred_check_branch
          %772 = sbr.rel (%p770) target = $region68
        $region67: #{tpu_custom_call.1} parent=43 // pred_region
          %s774 = ssub.s32 64, 64
          %775 = vsyncadd %s766, %s774
          %s776 = smul.addr %s29, 64
          %s777 = scalar_lea.hbm %s6, %s776
          %s779 = sshll.u32 %s769, 4
          %s780 = int_to_ptr.vmem [resolvable:$true] %s779
          %782 = dma.vmem_to_hbm [thread:$0]  %s780, 64, %s777, %s766
        $region68: #{tpu_custom_call.1} parent=43 // pred_fallthru
          _
      $region44: #{tpu_custom_call.1} parent=5 // pred_fallthru
        _
      %p783 = scmp.le.s32.totalorder 2, %s24
      // Predicated region
      $region69: #{tpu_custom_call.1} parent=5 // pred_check
        %p784 = pneg %p783
      $region70: #{tpu_custom_call.1} parent=5 // pred_check_branch
        %786 = sbr.rel (%p784) target = $region72
      $region71: #{tpu_custom_call.1} parent=5 // pred_region
        %s787 = ssub.s32 %s24, 2
        // Predicated region
        $region73: #{tpu_custom_call.1} parent=71 // pred_check
          %p788 = pneg %p209
        $region74: #{tpu_custom_call.1} parent=71 // pred_check_branch
          %790 = sbr.rel (%p788) target = $region76
        $region75: #{tpu_custom_call.1} parent=71 // pred_region
          %s791 = sand.u32 %s194, 1
          %s792 = scalar_lea.sflag [#allocation4], %s791
          %s793 = sand.u32 %s194, 1
          %s794 = smul.addr %s793, 4
          %s795 = scalar_lea.vmem [#allocation11], %s794
          %796 = dma.done %s792, 64
        $region76: #{tpu_custom_call.1} parent=71 // pred_fallthru
          _
      $region72: #{tpu_custom_call.1} parent=5 // pred_fallthru
        _
    $region6: #{tpu_custom_call.1} parent=1 // loop_footer
      %s28 = sadd.s32 1, %s24
    $region7: #{tpu_custom_call.1} parent=1 // loop_footer_branch
      %23 = sbr.rel target = $region3
    $region8: #{tpu_custom_call.1} parent=1 // loop_exit
      _
    %797 = vsyncpa [#allocation3], 1
    %s798 = scalar_lea.sflag [#allocation3], 1
    %799 = vsyncpa %s798, 1
    %800 = vsyncpa [#allocation6], 1
    %s801 = scalar_lea.sflag [#allocation6], 1
    %802 = vsyncpa %s801, 1
    %803 = vsyncpa [#allocation9], 1
    %s804 = scalar_lea.sflag [#allocation9], 1
    %805 = vsyncpa %s804, 1
    %806 = vsyncpa [#allocation4], 1
    %s807 = scalar_lea.sflag [#allocation4], 1
    %808 = vsyncpa %s807, 1

</llo_original>
